<compile_context>
chip_gen: v7x
topology: tpu7x:2x2x1
jax: 0.10.0
libtpu: 0.0.40
codegen_flags: <defaults>
</compile_context>

<pallas_src>
import functools

import jax
import jax.numpy as jnp
from jax import lax
from jax.experimental import pallas as pl
from jax.experimental.pallas import tpu as pltpu


def _round_up(x, m):
    return ((x + m - 1) // m) * m


def _num_tensorcores():
    """Best-effort TC count: v7x packs 2 TensorCores/chip; v5e/v6e have 1."""
    try:
        kind = jax.devices()[0].device_kind.lower()
    except Exception:  # pragma: no cover - no devices / unusual backend
        return 1
    return 2 if "v7" in kind else 1


def mlp_kernel(x_ref, w1_ref, b1_ref, w2_ref, b2_ref, w3_ref, b3_ref,
               w4_ref, b4_ref, o_ref):
    cdt = w1_ref.dtype  # MXU operand dtype (f32 or bf16); accumulation is f32.

    # (tb, 6) row-major block, one contiguous DMA; cast to compute dtype here.
    x = x_ref[...].astype(cdt)

    # Layer 1: contract feature axis of both operands -> (50, tb).
    # The small in-VMEM operand transpose lands on the idle XLU slot.
    h = lax.dot_general(
        w1_ref[...], x,
        dimension_numbers=(((1,), (1,)), ((), ())),
        preferred_element_type=jnp.float32) + b1_ref[...]
    h = jnp.maximum(h, 0.0).astype(cdt)                                  # (50, tb)

    h = jnp.dot(w2_ref[...], h, preferred_element_type=jnp.float32) + b2_ref[...]
    h = jnp.maximum(h, 0.0).astype(cdt)                                  # (100, tb)

    h = jnp.dot(w3_ref[...], h, preferred_element_type=jnp.float32) + b3_ref[...]
    h = jnp.maximum(h, 0.0)                                              # (150, tb), f32

    # Dropout(p=0.2): identity at inference time.
    # Final Linear(150 -> 1): VPU multiply + XLU sublane reduce -> lane-dense (1, tb).
    out = jnp.sum(h * w4_ref[...].astype(jnp.float32), axis=0, keepdims=True)
    out = out + b4_ref[...]                                              # (1, tb)
    o_ref[...] = out.astype(o_ref.dtype)


@functools.partial(jax.jit, static_argnames=("tb_max",))
def mlp_forward(x, params, tb_max=4096):
    """x: (B, 6) -> (B, 1). Weights: (out, in); biases: (out, 1) f32; w4: (150, 1)."""
    w1, b1, w2, b2, w3, b3, w4, b4 = params
    B, F_in = x.shape
    tb_max = _round_up(max(int(tb_max), 128), 128)

    # --- batch tile selection (batch lives in the 128-lane axis) -------------
    B_lane = _round_up(max(B, 1), 128)
    n_tc = _num_tensorcores()
    if n_tc > 1 and B_lane >= n_tc * 128:
        # v7x: even number of tiles so both TensorCores get equal lane counts.
        n_tiles = n_tc * max(1, pl.cdiv(B_lane, n_tc * tb_max))
        tb = _round_up(pl.cdiv(B_lane, n_tiles), 128)
        semantics = (pltpu.CORE_PARALLEL,)
    else:
        # Single-TC chips (v5e/v6e): the grid is a serial loop -> one big tile
        # per call (up to tb_max) to amortize per-grid-step overhead.
        tb = min(B_lane, tb_max)
        n_tiles = pl.cdiv(B_lane, tb)
        semantics = ("arbitrary",)
    B_pad = n_tiles * tb

    # Row-major (B_pad, 6) input: no transpose, each block is a contiguous DMA.
    x_p = x if B_pad == B else jnp.pad(x, ((0, B_pad - B), (0, 0)))

    def whole_spec(arr):
        # Grid-invariant block (constant index_map): fetched once, revisited.
        # (Weights/biases total ~80 KB, so double-buffering them is harmless.)
        return pl.BlockSpec(arr.shape, lambda i: (0, 0))

    out_t = pl.pallas_call(
        mlp_kernel,
        out_shape=jax.ShapeDtypeStruct((1, B_pad), jnp.float32),
        grid_spec=pltpu.PrefetchScalarGridSpec(
            num_scalar_prefetch=0,
            grid=(n_tiles,),
            in_specs=[
                pl.BlockSpec((tb, F_in), lambda i: (i, 0)),
                whole_spec(w1), whole_spec(b1),
                whole_spec(w2), whole_spec(b2),
                whole_spec(w3), whole_spec(b3),
                whole_spec(w4), whole_spec(b4),
            ],
            out_specs=pl.BlockSpec((1, tb), lambda i: (0, i)),
        ),
        compiler_params=pltpu.CompilerParams(
            dimension_semantics=semantics,
            vmem_limit_bytes=32 * 1024 * 1024,
        ),
    )(x_p, w1, b1, w2, b2, w3, b3, w4, b4)

    # Lane-dense (1, B_pad) -> (B, 1); padded columns (bias+ReLU of zeros) dropped.
    return out_t[0, :B][:, None]


def init_params(key, weight_dtype=jnp.float32):
    """Deterministic PyTorch-style (kaiming-uniform) init, feature-major layout.

    Weights layers 1-3: (out, in) in `weight_dtype`; layer 4 stored as a
    (150, 1) column for the multiply-reduce. Biases: (out, 1), always f32.
    """
    dims = [(6, 50), (50, 100), (100, 150), (150, 1)]
    params = []
    for li, (fan_in, fan_out) in enumerate(dims):
        key, kw, kb = jax.random.split(key, 3)
        bound = 1.0 / float(jnp.sqrt(jnp.asarray(fan_in, jnp.float32)))
        w = jax.random.uniform(kw, (fan_out, fan_in), jnp.float32, -bound, bound)
        b = jax.random.uniform(kb, (fan_out, 1), jnp.float32, -bound, bound)
        if li == len(dims) - 1:
            w = w.T                      # (150, 1) column for the final layer
            b = b.reshape(1, 1)
        params += [w.astype(weight_dtype), b.astype(jnp.float32)]
    return tuple(params)


def reference_forward(x, params):
    """Pure-JAX reference (f32, highest matmul precision)."""
    w1, b1, w2, b2, w3, b3, w4, b4 = params
    f32 = jnp.float32
    with jax.default_matmul_precision("highest"):
        h = jnp.maximum(x.astype(f32) @ w1.astype(f32).T + b1.astype(f32).T, 0.0)
        h = jnp.maximum(h @ w2.astype(f32).T + b2.astype(f32).T, 0.0)
        h = jnp.maximum(h @ w3.astype(f32).T + b3.astype(f32).T, 0.0)
        return h @ w4.astype(f32) + b4.astype(f32)


if __name__ == "__main__":
    key = jax.random.PRNGKey(0)
    kp, kx = jax.random.split(key)

    batch = 8
    x = jax.random.normal(kx, (batch, 6), jnp.float32)

    # f32 path: tight correctness check.
    params_f32 = init_params(kp, weight_dtype=jnp.float32)
    y = jax.block_until_ready(mlp_forward(x, params_f32))
    y_ref = reference_forward(x, params_f32)
    assert y.shape == (batch, 1), y.shape
    assert jnp.allclose(y, y_ref, atol=1e-5, rtol=1e-5), "f32 mismatch vs reference"

    # bf16-operand path (v6e/v7x fast path, f32 accumulation): loose check.
    # Note: activations (not just weights) are rounded to bf16 between layers.
    params_bf16 = init_params(kp, weight_dtype=jnp.bfloat16)
    y16 = jax.block_until_ready(mlp_forward(x, params_bf16))
    assert y16.shape == (batch, 1), y16.shape
    assert jnp.allclose(y16, y_ref, atol=5e-2, rtol=5e-2), "bf16 mismatch vs reference"

    # Larger, non-128-aligned batch: exercises padding + the big-tile path.
    xl = jax.random.normal(kx, (1000, 6), jnp.float32)
    yl = jax.block_until_ready(mlp_forward(xl, params_f32))
    assert yl.shape == (1000, 1), yl.shape
    assert jnp.allclose(yl, reference_forward(xl, params_f32), atol=1e-4, rtol=1e-4), \
        "f32 large-batch mismatch vs reference"

    print("KERNEL_OK")
</pallas_src>

<mosaic_0001>
module attributes {stable_mosaic.version = 11 : i64} {
  func.func @mlp_kernel(%arg0: i32, %arg1: memref<128x6xf32, #tpu.memory_space<vmem>>, %arg2: memref<50x6xf32, #tpu.memory_space<vmem>>, %arg3: memref<50x1xf32, #tpu.memory_space<vmem>>, %arg4: memref<100x50xf32, #tpu.memory_space<vmem>>, %arg5: memref<100x1xf32, #tpu.memory_space<vmem>>, %arg6: memref<150x100xf32, #tpu.memory_space<vmem>>, %arg7: memref<150x1xf32, #tpu.memory_space<vmem>>, %arg8: memref<150x1xf32, #tpu.memory_space<vmem>>, %arg9: memref<1x1xf32, #tpu.memory_space<vmem>>, %arg10: memref<1x128xf32, #tpu.memory_space<vmem>>) attributes {dimension_semantics = [#tpu.dimension_semantics<arbitrary>], iteration_bounds = array<i64: 1>, scalar_prefetch = 0 : i64, scratch_operands = 0 : i64, tpu.core_type = #tpu.core_type<tc>, window_params = [{transform_indices = @transform_0, window_bounds = array<i64: 128, 6>}, {pipeline_mode = #tpu.pipeline_mode<synchronous>, transform_indices = @transform_1, window_bounds = array<i64: 50, 6>}, {pipeline_mode = #tpu.pipeline_mode<synchronous>, transform_indices = @transform_2, window_bounds = array<i64: 50, 1>}, {pipeline_mode = #tpu.pipeline_mode<synchronous>, transform_indices = @transform_3, window_bounds = array<i64: 100, 50>}, {pipeline_mode = #tpu.pipeline_mode<synchronous>, transform_indices = @transform_4, window_bounds = array<i64: 100, 1>}, {pipeline_mode = #tpu.pipeline_mode<synchronous>, transform_indices = @transform_5, window_bounds = array<i64: 150, 100>}, {pipeline_mode = #tpu.pipeline_mode<synchronous>, transform_indices = @transform_6, window_bounds = array<i64: 150, 1>}, {pipeline_mode = #tpu.pipeline_mode<synchronous>, transform_indices = @transform_7, window_bounds = array<i64: 150, 1>}, {pipeline_mode = #tpu.pipeline_mode<synchronous>, transform_indices = @transform_8, window_bounds = array<i64: 1, 1>}, {transform_indices = @transform_9, window_bounds = array<i64: 1, 128>}]} {
    %c0 = arith.constant 0 : index
    %c0_0 = arith.constant 0 : index
    %0 = vector.load %arg1[%c0, %c0_0] : memref<128x6xf32, #tpu.memory_space<vmem>>, vector<128x6xf32>
    %c0_1 = arith.constant 0 : index
    %c0_2 = arith.constant 0 : index
    %1 = vector.load %arg2[%c0_1, %c0_2] : memref<50x6xf32, #tpu.memory_space<vmem>>, vector<50x6xf32>
    %cst = arith.constant dense<0.000000e+00> : vector<50x128xf32>
    %2 = tpu.matmul %1, %0, %cst {dimension_numbers = #tpu.dot_dimension_numbers<[1], [1], [0], [0], [0, 0, 1, 0], [], []>} : vector<50x6xf32>, vector<128x6xf32>, vector<50x128xf32> -> vector<50x128xf32>
    %c0_3 = arith.constant 0 : index
    %c0_4 = arith.constant 0 : index
    %3 = vector.load %arg3[%c0_3, %c0_4] : memref<50x1xf32, #tpu.memory_space<vmem>>, vector<50x1xf32>
    %4 = vector.broadcast %3 : vector<50x1xf32> to vector<50x128xf32>
    %5 = arith.addf %2, %4 : vector<50x128xf32>
    %cst_5 = arith.constant 0.000000e+00 : f32
    %6 = vector.broadcast %cst_5 : f32 to vector<50x128xf32>
    %7 = arith.maximumf %5, %6 : vector<50x128xf32>
    %c0_6 = arith.constant 0 : index
    %c0_7 = arith.constant 0 : index
    %8 = vector.load %arg4[%c0_6, %c0_7] : memref<100x50xf32, #tpu.memory_space<vmem>>, vector<100x50xf32>
    %cst_8 = arith.constant dense<0.000000e+00> : vector<100x128xf32>
    %9 = tpu.matmul %8, %7, %cst_8 {dimension_numbers = #tpu.dot_dimension_numbers<[1], [0], [0], [1], [0, 0, 1, 1], [], []>} : vector<100x50xf32>, vector<50x128xf32>, vector<100x128xf32> -> vector<100x128xf32>
    %c0_9 = arith.constant 0 : index
    %c0_10 = arith.constant 0 : index
    %10 = vector.load %arg5[%c0_9, %c0_10] : memref<100x1xf32, #tpu.memory_space<vmem>>, vector<100x1xf32>
    %11 = vector.broadcast %10 : vector<100x1xf32> to vector<100x128xf32>
    %12 = arith.addf %9, %11 : vector<100x128xf32>
    %cst_11 = arith.constant 0.000000e+00 : f32
    %13 = vector.broadcast %cst_11 : f32 to vector<100x128xf32>
    %14 = arith.maximumf %12, %13 : vector<100x128xf32>
    %c0_12 = arith.constant 0 : index
    %c0_13 = arith.constant 0 : index
    %15 = vector.load %arg6[%c0_12, %c0_13] : memref<150x100xf32, #tpu.memory_space<vmem>>, vector<150x100xf32>
    %cst_14 = arith.constant dense<0.000000e+00> : vector<150x128xf32>
    %16 = tpu.matmul %15, %14, %cst_14 {dimension_numbers = #tpu.dot_dimension_numbers<[1], [0], [0], [1], [0, 0, 1, 1], [], []>} : vector<150x100xf32>, vector<100x128xf32>, vector<150x128xf32> -> vector<150x128xf32>
    %c0_15 = arith.constant 0 : index
    %c0_16 = arith.constant 0 : index
    %17 = vector.load %arg7[%c0_15, %c0_16] : memref<150x1xf32, #tpu.memory_space<vmem>>, vector<150x1xf32>
    %18 = vector.broadcast %17 : vector<150x1xf32> to vector<150x128xf32>
    %19 = arith.addf %16, %18 : vector<150x128xf32>
    %cst_17 = arith.constant 0.000000e+00 : f32
    %20 = vector.broadcast %cst_17 : f32 to vector<150x128xf32>
    %21 = arith.maximumf %19, %20 : vector<150x128xf32>
    %c0_18 = arith.constant 0 : index
    %c0_19 = arith.constant 0 : index
    %22 = vector.load %arg8[%c0_18, %c0_19] : memref<150x1xf32, #tpu.memory_space<vmem>>, vector<150x1xf32>
    %23 = vector.broadcast %22 : vector<150x1xf32> to vector<150x128xf32>
    %24 = arith.mulf %21, %23 : vector<150x128xf32>
    %cst_20 = arith.constant dense<0.000000e+00> : vector<128xf32>
    %25 = vector.multi_reduction <add>, %24, %cst_20 [0] : vector<150x128xf32> to vector<128xf32>
    %26 = vector.shape_cast %25 : vector<128xf32> to vector<1x128xf32>
    %c0_21 = arith.constant 0 : index
    %c0_22 = arith.constant 0 : index
    %27 = vector.load %arg9[%c0_21, %c0_22] : memref<1x1xf32, #tpu.memory_space<vmem>>, vector<1x1xf32>
    %28 = vector.broadcast %27 : vector<1x1xf32> to vector<1x128xf32>
    %29 = arith.addf %26, %28 : vector<1x128xf32>
    %c0_23 = arith.constant 0 : index
    %c0_24 = arith.constant 0 : index
    %30 = vector.load %arg10[%c0_23, %c0_24] : memref<1x128xf32, #tpu.memory_space<vmem>>, vector<1x128xf32>
    tpu.vector_store %arg10[%c0_23, %c0_24], %29 {strides = array<i32>} : memref<1x128xf32, #tpu.memory_space<vmem>>, vector<1x128xf32>,
    return
  }
  func.func @transform_0(%arg0: i32) -> (i32, i32) {
    %c0_i32 = arith.constant 0 : i32
    %c0_i32_0 = arith.constant 0 : i32
    return %arg0, %c0_i32 : i32, i32
  }
  func.func @transform_1(%arg0: i32) -> (i32, i32) {
    %c0_i32 = arith.constant 0 : i32
    %c0_i32_0 = arith.constant 0 : i32
    %c0_i32_1 = arith.constant 0 : i32
    return %c0_i32, %c0_i32_0 : i32, i32
  }
  func.func @transform_2(%arg0: i32) -> (i32, i32) {
    %c0_i32 = arith.constant 0 : i32
    %c0_i32_0 = arith.constant 0 : i32
    %c0_i32_1 = arith.constant 0 : i32
    return %c0_i32, %c0_i32_0 : i32, i32
  }
  func.func @transform_3(%arg0: i32) -> (i32, i32) {
    %c0_i32 = arith.constant 0 : i32
    %c0_i32_0 = arith.constant 0 : i32
    %c0_i32_1 = arith.constant 0 : i32
    return %c0_i32, %c0_i32_0 : i32, i32
  }
  func.func @transform_4(%arg0: i32) -> (i32, i32) {
    %c0_i32 = arith.constant 0 : i32
    %c0_i32_0 = arith.constant 0 : i32
    %c0_i32_1 = arith.constant 0 : i32
    return %c0_i32, %c0_i32_0 : i32, i32
  }
  func.func @transform_5(%arg0: i32) -> (i32, i32) {
    %c0_i32 = arith.constant 0 : i32
    %c0_i32_0 = arith.constant 0 : i32
    %c0_i32_1 = arith.constant 0 : i32
    return %c0_i32, %c0_i32_0 : i32, i32
  }
  func.func @transform_6(%arg0: i32) -> (i32, i32) {
    %c0_i32 = arith.constant 0 : i32
    %c0_i32_0 = arith.constant 0 : i32
    %c0_i32_1 = arith.constant 0 : i32
    return %c0_i32, %c0_i32_0 : i32, i32
  }
  func.func @transform_7(%arg0: i32) -> (i32, i32) {
    %c0_i32 = arith.constant 0 : i32
    %c0_i32_0 = arith.constant 0 : i32
    %c0_i32_1 = arith.constant 0 : i32
    return %c0_i32, %c0_i32_0 : i32, i32
  }
  func.func @transform_8(%arg0: i32) -> (i32, i32) {
    %c0_i32 = arith.constant 0 : i32
    %c0_i32_0 = arith.constant 0 : i32
    %c0_i32_1 = arith.constant 0 : i32
    return %c0_i32, %c0_i32_0 : i32, i32
  }
  func.func @transform_9(%arg0: i32) -> (i32, i32) {
    %c0_i32 = arith.constant 0 : i32
    %c0_i32_0 = arith.constant 0 : i32
    return %c0_i32, %arg0 : i32, i32
  }
}

</mosaic_0001>

<llo_original>
// kernel: mlp_forward.1
$region0: #{mlp_forward.1}
  #allocation0 [shape = 'u32[]', space=smem, size = 0x4, offset = 0x4, fixed_abs, tag = 'smem constant byte address 0x4 - core index']
  #allocation1 [shape = 'u32[144,128]{1,0:T(1,128)}', space=vmem, size = 0x12000, scoped, tag = 'internal scratch']
  #allocation2 [shape = 'f32[1,1]{1,0:T(1,128)S(1)}', space=vmem, size = 0x200, scoped, tag = 'scoped memory for mlp_forward.1']
  %s0 = inlined_call_operand.vmem [shape: f32[128,6], index: 0, kind: input, shape index: {}]
  %s1 = inlined_call_operand.vmem [shape: f32[50,6], index: 1, kind: input, shape index: {}]
  %s2 = inlined_call_operand.vmem [shape: f32[50,1], index: 2, kind: input, shape index: {}]
  %s3 = inlined_call_operand.vmem [shape: f32[100,50], index: 3, kind: input, shape index: {}]
  %s4 = inlined_call_operand.vmem [shape: f32[100,1], index: 4, kind: input, shape index: {}]
  %s5 = inlined_call_operand.vmem [shape: f32[150,100], index: 5, kind: input, shape index: {}]
  %s6 = inlined_call_operand.vmem [shape: f32[150,1], index: 6, kind: input, shape index: {}]
  %s7 = inlined_call_operand.vmem [shape: f32[150,1], index: 7, kind: input, shape index: {}]
  %s8 = inlined_call_operand.<no memory space> [shape: f32[1,1], index: 8, kind: input, shape index: {}]
  %s9 = inlined_call_operand.vmem [shape: f32[1,128], index: 9, kind: output, shape index: {}]
  %s10 = sld [smem:[#allocation0]]
  $region46: #{mlp_forward.1} parent=0
    _
  %s12 = ssub.s32 1, %s10
  %s13 = scalar_select 0, %s12, %s10
  %v14 = vstv %s8
  %15 = vst [vmem:[#allocation2] sm:$0x1] %v14
  // Predicated region
  $region2: #{mlp_forward.1} parent=0 // pred_check
    _
  $region3: #{mlp_forward.1} parent=0 // pred_check_branch
    %17 = sbr.rel (0) target = $region5
  $region4: #{mlp_forward.1} parent=0 // pred_region
    _
  $region5: #{mlp_forward.1} parent=0 // pred_fallthru
    _
  // Predicated region
  $region6: #{mlp_forward.1} parent=0 // pred_check
    _
  $region7: #{mlp_forward.1} parent=0 // pred_check_branch
    %19 = sbr.rel (0) target = $region9
  $region8: #{mlp_forward.1} parent=0 // pred_region
    _
  $region9: #{mlp_forward.1} parent=0 // pred_fallthru
    _
  // Predicated region
  $region10: #{mlp_forward.1} parent=0 // pred_check
    _
  $region11: #{mlp_forward.1} parent=0 // pred_check_branch
    %21 = sbr.rel (0) target = $region13
  $region12: #{mlp_forward.1} parent=0 // pred_region
    _
  $region13: #{mlp_forward.1} parent=0 // pred_fallthru
    _
  // Predicated region
  $region14: #{mlp_forward.1} parent=0 // pred_check
    _
  $region15: #{mlp_forward.1} parent=0 // pred_check_branch
    %23 = sbr.rel (0) target = $region17
  $region16: #{mlp_forward.1} parent=0 // pred_region
    _
  $region17: #{mlp_forward.1} parent=0 // pred_fallthru
    _
  // Predicated region
  $region18: #{mlp_forward.1} parent=0 // pred_check
    _
  $region19: #{mlp_forward.1} parent=0 // pred_check_branch
    %25 = sbr.rel (0) target = $region21
  $region20: #{mlp_forward.1} parent=0 // pred_region
    _
  $region21: #{mlp_forward.1} parent=0 // pred_fallthru
    _
  // Predicated region
  $region22: #{mlp_forward.1} parent=0 // pred_check
    _
  $region23: #{mlp_forward.1} parent=0 // pred_check_branch
    %27 = sbr.rel (0) target = $region25
  $region24: #{mlp_forward.1} parent=0 // pred_region
    _
  $region25: #{mlp_forward.1} parent=0 // pred_fallthru
    _
  // Predicated region
  $region26: #{mlp_forward.1} parent=0 // pred_check
    _
  $region27: #{mlp_forward.1} parent=0 // pred_check_branch
    %29 = sbr.rel (0) target = $region29
  $region28: #{mlp_forward.1} parent=0 // pred_region
    _
  $region29: #{mlp_forward.1} parent=0 // pred_fallthru
    _
  // Predicated region
  $region30: #{mlp_forward.1} parent=0 // pred_check
    _
  $region31: #{mlp_forward.1} parent=0 // pred_check_branch
    %31 = sbr.rel (0) target = $region33
  $region32: #{mlp_forward.1} parent=0 // pred_region
    _
  $region33: #{mlp_forward.1} parent=0 // pred_fallthru
    _
  // Predicated region
  $region34: #{mlp_forward.1} parent=0 // pred_check
    _
  $region35: #{mlp_forward.1} parent=0 // pred_check_branch
    %33 = sbr.rel (0) target = $region37
  $region36: #{mlp_forward.1} parent=0 // pred_region
    _
  $region37: #{mlp_forward.1} parent=0 // pred_fallthru
    _
  %v34 = vld [vmem:[%s0] sm:$0xff]
  %v35 = vld [vmem:[%s0 + $0x8] sm:$0xff]
  %v36 = vld [vmem:[%s0 + $0x10] sm:$0xff]
  %v37 = vld [vmem:[%s0 + $0x18] sm:$0xff]
  %v38 = vld [vmem:[%s0 + $0x20] sm:$0xff]
  %v39 = vld [vmem:[%s0 + $0x28] sm:$0xff]
  %v40 = vld [vmem:[%s0 + $0x30] sm:$0xff]
  %v41 = vld [vmem:[%s0 + $0x38] sm:$0xff]
  %v42 = vld [vmem:[%s0 + $0x40] sm:$0xff]
  %v43 = vld [vmem:[%s0 + $0x48] sm:$0xff]
  %v44 = vld [vmem:[%s0 + $0x50] sm:$0xff]
  %v45 = vld [vmem:[%s0 + $0x58] sm:$0xff]
  %v46 = vld [vmem:[%s0 + $0x60] sm:$0xff]
  %v47 = vld [vmem:[%s0 + $0x68] sm:$0xff]
  %v48 = vld [vmem:[%s0 + $0x70] sm:$0xff]
  %v49 = vld [vmem:[%s0 + $0x78] sm:$0xff]
  %v50 = vld [vmem:[%s1] sm:$0xff]
  %v51 = vld [vmem:[%s1 + $0x8] sm:$0xff]
  %v52 = vld [vmem:[%s1 + $0x10] sm:$0xff]
  %v53 = vld [vmem:[%s1 + $0x18] sm:$0xff]
  %v54 = vld [vmem:[%s1 + $0x20] sm:$0xff]
  %v55 = vld [vmem:[%s1 + $0x28] sm:$0xff]
  %v56 = vld [vmem:[%s1 + $0x30] sm:$0x3]
  %v57 = vld [vmem:[%s2] sm:$0xff]
  %v58 = vld [vmem:[%s2 + $0x8] sm:$0xff]
  %v59 = vld [vmem:[%s2 + $0x10] sm:$0xff]
  %v60 = vld [vmem:[%s2 + $0x18] sm:$0xff]
  %v61 = vld [vmem:[%s2 + $0x20] sm:$0xff]
  %v62 = vld [vmem:[%s2 + $0x28] sm:$0xff]
  %v63 = vld [vmem:[%s2 + $0x30] sm:$0x3]
  %65 = vset.pattern.permute.xlu0 0
  %66 = vperm.xlu0 %65, %v57
  %v67 = vpop.permute.xlu0 %66
  %70 = vset.pattern.permute.xlu0 0
  %71 = vperm.xlu0 %70, %v58
  %v72 = vpop.permute.xlu0 %71
  %75 = vset.pattern.permute.xlu0 0
  %76 = vperm.xlu0 %75, %v59
  %v77 = vpop.permute.xlu0 %76
  %80 = vset.pattern.permute.xlu0 0
  %81 = vperm.xlu0 %80, %v60
  %v82 = vpop.permute.xlu0 %81
  %85 = vset.pattern.permute.xlu0 0
  %86 = vperm.xlu0 %85, %v61
  %v87 = vpop.permute.xlu0 %86
  %90 = vset.pattern.permute.xlu0 0
  %91 = vperm.xlu0 %90, %v62
  %v92 = vpop.permute.xlu0 %91
  %95 = vset.pattern.permute.xlu0 0
  %96 = vperm.xlu0 %95, %v63
  %v97 = vpop.permute.xlu0 %96
  %vm99 = vcmask 48128
  %v101 = vsel %vm99, %v50, 0
  %v104 = vsel %vm99, %v51, 0
  %v107 = vsel %vm99, %v52, 0
  %v110 = vsel %vm99, %v53, 0
  %v113 = vsel %vm99, %v54, 0
  %v116 = vsel %vm99, %v55, 0
  %v119 = vsel %vm99, %v56, 0
  %v122 = vsel %vm99, %v34, 0
  %v125 = vsel %vm99, %v35, 0
  %v128 = vsel %vm99, %v36, 0
  %v131 = vsel %vm99, %v37, 0
  %v134 = vsel %vm99, %v38, 0
  %v137 = vsel %vm99, %v39, 0
  %v140 = vsel %vm99, %v40, 0
  %v143 = vsel %vm99, %v41, 0
  %v146 = vsel %vm99, %v42, 0
  %v149 = vsel %vm99, %v43, 0
  %v152 = vsel %vm99, %v44, 0
  %v155 = vsel %vm99, %v45, 0
  %v158 = vsel %vm99, %v46, 0
  %v161 = vsel %vm99, %v47, 0
  %v164 = vsel %vm99, %v48, 0
  %v167 = vsel %vm99, %v49, 0
  %169 = vmatprep.subr.mxu0 0.0
  %170 = vmatpush1.xpose.msra.mxu0 %v122
  %171 = vmatprep.subr.mxu0 0.0
  %172 = vmatpush1.xpose.msra.mxu0 %v125
  %173 = vmatprep.subr.mxu0 0.0
  %174 = vmatpush1.xpose.msra.mxu0 %v128
  %175 = vmatprep.subr.mxu0 0.0
  %176 = vmatpush1.xpose.msra.mxu0 %v131
  %177 = vmatprep.subr.mxu0 0.0
  %178 = vmatpush1.xpose.msra.mxu0 %v134
  %179 = vmatprep.subr.mxu0 0.0
  %180 = vmatpush1.xpose.msra.mxu0 %v137
  %181 = vmatprep.subr.mxu0 0.0
  %182 = vmatpush1.xpose.msra.mxu0 %v140
  %183 = vmatprep.subr.mxu0 0.0
  %184 = vmatpush1.xpose.msra.mxu0 %v143
  %185 = vmatprep.subr.mxu0 0.0
  %186 = vmatpush1.xpose.msra.mxu0 %v146
  %187 = vmatprep.subr.mxu0 0.0
  %188 = vmatpush1.xpose.msra.mxu0 %v149
  %189 = vmatprep.subr.mxu0 0.0
  %190 = vmatpush1.xpose.msra.mxu0 %v152
  %191 = vmatprep.subr.mxu0 0.0
  %192 = vmatpush1.xpose.msra.mxu0 %v155
  %193 = vmatprep.subr.mxu0 0.0
  %194 = vmatpush1.xpose.msra.mxu0 %v158
  %195 = vmatprep.subr.mxu0 0.0
  %196 = vmatpush1.xpose.msra.mxu0 %v161
  %197 = vmatprep.subr.mxu0 0.0
  %198 = vmatpush1.xpose.msra.mxu0 %v164
  %199 = vmatprep.subr.mxu0 0.0
  %200 = vmatpush1.xpose.msra.mxu0 %v167
  %201 = vmatprep.subr.mxu0 0.0
  %202 = vmatpush1.xpose.msra.mxu0 0.0
  %203 = vmatprep.subr.mxu0 0.0
  %204 = vmatpush1.xpose.msra.mxu0 0.0
  %205 = vmatprep.subr.mxu0 0.0
  %206 = vmatpush1.xpose.msra.mxu0 0.0
  %207 = vmatprep.subr.mxu0 0.0
  %208 = vmatpush1.xpose.msra.mxu0 0.0
  %209 = vmatprep.subr.mxu0 0.0
  %210 = vmatpush1.xpose.msra.mxu0 0.0
  %211 = vmatprep.subr.mxu0 0.0
  %212 = vmatpush1.xpose.msra.mxu0 0.0
  %213 = vmatprep.subr.mxu0 0.0
  %214 = vmatpush1.xpose.msra.mxu0 0.0
  %215 = vmatprep.subr.mxu0 0.0
  %216 = vmatpush1.xpose.msra.mxu0 0.0
  %217 = vmatprep.subr.mxu0 0.0
  %218 = vmatpush1.xpose.msra.mxu0 0.0
  %219 = vmatprep.subr.mxu0 0.0
  %220 = vmatpush1.xpose.msra.mxu0 0.0
  %221 = vmatprep.subr.mxu0 0.0
  %222 = vmatpush1.xpose.msra.mxu0 0.0
  %223 = vmatprep.subr.mxu0 0.0
  %224 = vmatpush1.xpose.msra.mxu0 0.0
  %225 = vmatprep.subr.mxu0 0.0
  %226 = vmatpush1.xpose.msra.mxu0 0.0
  %227 = vmatprep.subr.mxu0 0.0
  %228 = vmatpush1.xpose.msra.mxu0 0.0
  %229 = vmatprep.subr.mxu0 0.0
  %230 = vmatpush1.xpose.msra.mxu0 0.0
  %231 = vmatprep.subr.mxu0 0.0
  %232 = vmatpush1.xpose.msra.mxu0 0.0
  %233 = vmatprep.mubr.f32.mxu0 0.0
  %234 = vmatmul.mubr.f32.gmra.mrb[0].mxu0 %v101
  %v235 = vpop.f32.mrb[0].mxu0
  %v236 = vadd.f32 %v67, %v235
  %v237 = vpop.f32.mrb[0].mxu0
  %238 = vmatprep.mubr.f32.mxu0 0.0
  %239 = vmatmul.mubr.f32.gmra.mrb[0].mxu0 %v104
  %v240 = vpop.f32.mrb[0].mxu0
  %v241 = vadd.f32 %v72, %v240
  %v242 = vpop.f32.mrb[0].mxu0
  %243 = vmatprep.mubr.f32.mxu0 0.0
  %244 = vmatmul.mubr.f32.gmra.mrb[0].mxu0 %v107
  %v245 = vpop.f32.mrb[0].mxu0
  %v246 = vadd.f32 %v77, %v245
  %v247 = vpop.f32.mrb[0].mxu0
  %248 = vmatprep.mubr.f32.mxu0 0.0
  %249 = vmatmul.mubr.f32.gmra.mrb[0].mxu0 %v110
  %v250 = vpop.f32.mrb[0].mxu0
  %v251 = vadd.f32 %v82, %v250
  %v252 = vpop.f32.mrb[0].mxu0
  %253 = vmatprep.mubr.f32.mxu0 0.0
  %254 = vmatmul.mubr.f32.gmra.mrb[0].mxu0 %v113
  %v255 = vpop.f32.mrb[0].mxu0
  %v256 = vadd.f32 %v87, %v255
  %v257 = vpop.f32.mrb[0].mxu0
  %258 = vmatprep.mubr.f32.mxu0 0.0
  %259 = vmatmul.mubr.f32.gmra.mrb[0].mxu0 %v116
  %v260 = vpop.f32.mrb[0].mxu0
  %v261 = vadd.f32 %v92, %v260
  %v262 = vpop.f32.mrb[0].mxu0
  %263 = vmatprep.mubr.f32.mxu0 0.0
  %264 = vmatmul.mubr.f32.gmra.mrb[0].mxu0 %v119
  %v265 = vpop.f32.mrb[0].mxu0
  %v266 = vadd.f32 %v97, %v265
  %v267 = vpop.f32.mrb[0].mxu0
  %268 = vdwg.mxu0
  %v269 = vmax.f32 %v236, 0.0
  %v270 = vmax.f32 %v241, 0.0
  %v271 = vmax.f32 %v246, 0.0
  %v272 = vmax.f32 %v251, 0.0
  %v273 = vmax.f32 %v256, 0.0
  %v274 = vmax.f32 %v261, 0.0
  %v275 = vmax.f32 %v266, 0.0
  %v276 = vld [vmem:[%s3] sm:$0xff]
  %v277 = vld [vmem:[%s3 + $0x8] sm:$0xff]
  %v278 = vld [vmem:[%s3 + $0x10] sm:$0xff]
  %v279 = vld [vmem:[%s3 + $0x18] sm:$0xff]
  %v280 = vld [vmem:[%s3 + $0x20] sm:$0xff]
  %v281 = vld [vmem:[%s3 + $0x28] sm:$0xff]
  %v282 = vld [vmem:[%s3 + $0x30] sm:$0xff]
  %v283 = vld [vmem:[%s3 + $0x38] sm:$0xff]
  %v284 = vld [vmem:[%s3 + $0x40] sm:$0xff]
  %v285 = vld [vmem:[%s3 + $0x48] sm:$0xff]
  %v286 = vld [vmem:[%s3 + $0x50] sm:$0xff]
  %v287 = vld [vmem:[%s3 + $0x58] sm:$0xff]
  %v288 = vld [vmem:[%s3 + $0x60] sm:$0xf]
  %v289 = vld [vmem:[%s4] sm:$0xff]
  %v290 = vld [vmem:[%s4 + $0x8] sm:$0xff]
  %v291 = vld [vmem:[%s4 + $0x10] sm:$0xff]
  %v292 = vld [vmem:[%s4 + $0x18] sm:$0xff]
  %v293 = vld [vmem:[%s4 + $0x20] sm:$0xff]
  %v294 = vld [vmem:[%s4 + $0x28] sm:$0xff]
  %v295 = vld [vmem:[%s4 + $0x30] sm:$0xff]
  %v296 = vld [vmem:[%s4 + $0x38] sm:$0xff]
  %v297 = vld [vmem:[%s4 + $0x40] sm:$0xff]
  %v298 = vld [vmem:[%s4 + $0x48] sm:$0xff]
  %v299 = vld [vmem:[%s4 + $0x50] sm:$0xff]
  %v300 = vld [vmem:[%s4 + $0x58] sm:$0xff]
  %v301 = vld [vmem:[%s4 + $0x60] sm:$0xf]
  %303 = vset.pattern.permute.xlu0 0
  %304 = vperm.xlu0 %303, %v289
  %v305 = vpop.permute.xlu0 %304
  %308 = vset.pattern.permute.xlu0 0
  %309 = vperm.xlu0 %308, %v290
  %v310 = vpop.permute.xlu0 %309
  %313 = vset.pattern.permute.xlu0 0
  %314 = vperm.xlu0 %313, %v291
  %v315 = vpop.permute.xlu0 %314
  %318 = vset.pattern.permute.xlu0 0
  %319 = vperm.xlu0 %318, %v292
  %v320 = vpop.permute.xlu0 %319
  %323 = vset.pattern.permute.xlu0 0
  %324 = vperm.xlu0 %323, %v293
  %v325 = vpop.permute.xlu0 %324
  %328 = vset.pattern.permute.xlu0 0
  %329 = vperm.xlu0 %328, %v294
  %v330 = vpop.permute.xlu0 %329
  %333 = vset.pattern.permute.xlu0 0
  %334 = vperm.xlu0 %333, %v295
  %v335 = vpop.permute.xlu0 %334
  %338 = vset.pattern.permute.xlu0 0
  %339 = vperm.xlu0 %338, %v296
  %v340 = vpop.permute.xlu0 %339
  %343 = vset.pattern.permute.xlu0 0
  %344 = vperm.xlu0 %343, %v297
  %v345 = vpop.permute.xlu0 %344
  %348 = vset.pattern.permute.xlu0 0
  %349 = vperm.xlu0 %348, %v298
  %v350 = vpop.permute.xlu0 %349
  %353 = vset.pattern.permute.xlu0 0
  %354 = vperm.xlu0 %353, %v299
  %v355 = vpop.permute.xlu0 %354
  %358 = vset.pattern.permute.xlu0 0
  %359 = vperm.xlu0 %358, %v300
  %v360 = vpop.permute.xlu0 %359
  %363 = vset.pattern.permute.xlu0 0
  %364 = vperm.xlu0 %363, %v301
  %v365 = vpop.permute.xlu0 %364
  %vm367 = vcmask 408576
  %v369 = vsel %vm367, %v276, 0
  %v372 = vsel %vm367, %v277, 0
  %v375 = vsel %vm367, %v278, 0
  %v378 = vsel %vm367, %v279, 0
  %v381 = vsel %vm367, %v280, 0
  %v384 = vsel %vm367, %v281, 0
  %v387 = vsel %vm367, %v282, 0
  %v390 = vsel %vm367, %v283, 0
  %v393 = vsel %vm367, %v284, 0
  %v396 = vsel %vm367, %v285, 0
  %v399 = vsel %vm367, %v286, 0
  %v402 = vsel %vm367, %v287, 0
  %v405 = vsel %vm367, %v288, 0
  %vm407 = vcmask 1041408
  %v409 = vsel %vm407, %v275, 0
  %411 = vmatprep.subr.mxu0 0.0
  %412 = vmatpush1.msra.mxu0 %v269
  %413 = vmatprep.subr.mxu0 0.0
  %414 = vmatpush1.msra.mxu0 %v270
  %415 = vmatprep.subr.mxu0 0.0
  %416 = vmatpush1.msra.mxu0 %v271
  %417 = vmatprep.subr.mxu0 0.0
  %418 = vmatpush1.msra.mxu0 %v272
  %419 = vmatprep.subr.mxu0 0.0
  %420 = vmatpush1.msra.mxu0 %v273
  %421 = vmatprep.subr.mxu0 0.0
  %422 = vmatpush1.msra.mxu0 %v274
  %423 = vmatprep.subr.mxu0 0.0
  %424 = vmatpush1.msra.mxu0 %v409
  %425 = vmatprep.subr.mxu0 0.0
  %426 = vmatpush1.msra.mxu0 0.0
  %427 = vmatprep.subr.mxu0 0.0
  %428 = vmatpush1.msra.mxu0 0.0
  %429 = vmatprep.subr.mxu0 0.0
  %430 = vmatpush1.msra.mxu0 0.0
  %431 = vmatprep.subr.mxu0 0.0
  %432 = vmatpush1.msra.mxu0 0.0
  %433 = vmatprep.subr.mxu0 0.0
  %434 = vmatpush1.msra.mxu0 0.0
  %435 = vmatprep.subr.mxu0 0.0
  %436 = vmatpush1.msra.mxu0 0.0
  %437 = vmatprep.subr.mxu0 0.0
  %438 = vmatpush1.msra.mxu0 0.0
  %439 = vmatprep.subr.mxu0 0.0
  %440 = vmatpush1.msra.mxu0 0.0
  %441 = vmatprep.subr.mxu0 0.0
  %442 = vmatpush1.msra.mxu0 0.0
  %443 = vmatprep.subr.mxu0 0.0
  %444 = vmatpush1.msra.mxu0 0.0
  %445 = vmatprep.subr.mxu0 0.0
  %446 = vmatpush1.msra.mxu0 0.0
  %447 = vmatprep.subr.mxu0 0.0
  %448 = vmatpush1.msra.mxu0 0.0
  %449 = vmatprep.subr.mxu0 0.0
  %450 = vmatpush1.msra.mxu0 0.0
  %451 = vmatprep.subr.mxu0 0.0
  %452 = vmatpush1.msra.mxu0 0.0
  %453 = vmatprep.subr.mxu0 0.0
  %454 = vmatpush1.msra.mxu0 0.0
  %455 = vmatprep.subr.mxu0 0.0
  %456 = vmatpush1.msra.mxu0 0.0
  %457 = vmatprep.subr.mxu0 0.0
  %458 = vmatpush1.msra.mxu0 0.0
  %459 = vmatprep.subr.mxu0 0.0
  %460 = vmatpush1.msra.mxu0 0.0
  %461 = vmatprep.subr.mxu0 0.0
  %462 = vmatpush1.msra.mxu0 0.0
  %463 = vmatprep.subr.mxu0 0.0
  %464 = vmatpush1.msra.mxu0 0.0
  %465 = vmatprep.subr.mxu0 0.0
  %466 = vmatpush1.msra.mxu0 0.0
  %467 = vmatprep.subr.mxu0 0.0
  %468 = vmatpush1.msra.mxu0 0.0
  %469 = vmatprep.subr.mxu0 0.0
  %470 = vmatpush1.msra.mxu0 0.0
  %471 = vmatprep.subr.mxu0 0.0
  %472 = vmatpush1.msra.mxu0 0.0
  %473 = vmatprep.subr.mxu0 0.0
  %474 = vmatpush1.msra.mxu0 0.0
  %475 = vmatprep.mubr.f32.mxu0 0.0
  %476 = vmatmul.mubr.f32.gmra.mrb[0].mxu0 %v369
  %v477 = vpop.f32.mrb[0].mxu0
  %v478 = vadd.f32 %v305, %v477
  %v479 = vpop.f32.mrb[0].mxu0
  %480 = vmatprep.mubr.f32.mxu0 0.0
  %481 = vmatmul.mubr.f32.gmra.mrb[0].mxu0 %v372
  %v482 = vpop.f32.mrb[0].mxu0
  %v483 = vadd.f32 %v310, %v482
  %v484 = vpop.f32.mrb[0].mxu0
  %485 = vmatprep.mubr.f32.mxu0 0.0
  %486 = vmatmul.mubr.f32.gmra.mrb[0].mxu0 %v375
  %v487 = vpop.f32.mrb[0].mxu0
  %v488 = vadd.f32 %v315, %v487
  %v489 = vpop.f32.mrb[0].mxu0
  %490 = vmatprep.mubr.f32.mxu0 0.0
  %491 = vmatmul.mubr.f32.gmra.mrb[0].mxu0 %v378
  %v492 = vpop.f32.mrb[0].mxu0
  %v493 = vadd.f32 %v320, %v492
  %v494 = vpop.f32.mrb[0].mxu0
  %495 = vmatprep.mubr.f32.mxu0 0.0
  %496 = vmatmul.mubr.f32.gmra.mrb[0].mxu0 %v381
  %v497 = vpop.f32.mrb[0].mxu0
  %v498 = vadd.f32 %v325, %v497
  %v499 = vpop.f32.mrb[0].mxu0
  %500 = vmatprep.mubr.f32.mxu0 0.0
  %501 = vmatmul.mubr.f32.gmra.mrb[0].mxu0 %v384
  %v502 = vpop.f32.mrb[0].mxu0
  %v503 = vadd.f32 %v330, %v502
  %v504 = vpop.f32.mrb[0].mxu0
  %505 = vmatprep.mubr.f32.mxu0 0.0
  %506 = vmatmul.mubr.f32.gmra.mrb[0].mxu0 %v387
  %v507 = vpop.f32.mrb[0].mxu0
  %v508 = vadd.f32 %v335, %v507
  %v509 = vpop.f32.mrb[0].mxu0
  %510 = vmatprep.mubr.f32.mxu0 0.0
  %511 = vmatmul.mubr.f32.gmra.mrb[0].mxu0 %v390
  %v512 = vpop.f32.mrb[0].mxu0
  %v513 = vadd.f32 %v340, %v512
  %v514 = vpop.f32.mrb[0].mxu0
  %515 = vmatprep.mubr.f32.mxu0 0.0
  %516 = vmatmul.mubr.f32.gmra.mrb[0].mxu0 %v393
  %v517 = vpop.f32.mrb[0].mxu0
  %v518 = vadd.f32 %v345, %v517
  %v519 = vpop.f32.mrb[0].mxu0
  %520 = vmatprep.mubr.f32.mxu0 0.0
  %521 = vmatmul.mubr.f32.gmra.mrb[0].mxu0 %v396
  %v522 = vpop.f32.mrb[0].mxu0
  %v523 = vadd.f32 %v350, %v522
  %v524 = vpop.f32.mrb[0].mxu0
  %525 = vmatprep.mubr.f32.mxu0 0.0
  %526 = vmatmul.mubr.f32.gmra.mrb[0].mxu0 %v399
  %v527 = vpop.f32.mrb[0].mxu0
  %v528 = vadd.f32 %v355, %v527
  %v529 = vpop.f32.mrb[0].mxu0
  %530 = vmatprep.mubr.f32.mxu0 0.0
  %531 = vmatmul.mubr.f32.gmra.mrb[0].mxu0 %v402
  %v532 = vpop.f32.mrb[0].mxu0
  %v533 = vadd.f32 %v360, %v532
  %v534 = vpop.f32.mrb[0].mxu0
  %535 = vmatprep.mubr.f32.mxu0 0.0
  %536 = vmatmul.mubr.f32.gmra.mrb[0].mxu0 %v405
  %v537 = vpop.f32.mrb[0].mxu0
  %v538 = vadd.f32 %v365, %v537
  %v539 = vpop.f32.mrb[0].mxu0
  %540 = vdwg.mxu0
  %v541 = vmax.f32 %v478, 0.0
  %v542 = vmax.f32 %v483, 0.0
  %v543 = vmax.f32 %v488, 0.0
  %v544 = vmax.f32 %v493, 0.0
  %v545 = vmax.f32 %v498, 0.0
  %v546 = vmax.f32 %v503, 0.0
  %v547 = vmax.f32 %v508, 0.0
  %v548 = vmax.f32 %v513, 0.0
  %v549 = vmax.f32 %v518, 0.0
  %v550 = vmax.f32 %v523, 0.0
  %v551 = vmax.f32 %v528, 0.0
  %v552 = vmax.f32 %v533, 0.0
  %v553 = vmax.f32 %v538, 0.0
  %v554 = vld [vmem:[%s5] sm:$0xff]
  %v555 = vld [vmem:[%s5 + $0x8] sm:$0xff]
  %v556 = vld [vmem:[%s5 + $0x10] sm:$0xff]
  %v557 = vld [vmem:[%s5 + $0x18] sm:$0xff]
  %v558 = vld [vmem:[%s5 + $0x20] sm:$0xff]
  %v559 = vld [vmem:[%s5 + $0x28] sm:$0xff]
  %v560 = vld [vmem:[%s5 + $0x30] sm:$0xff]
  %v561 = vld [vmem:[%s5 + $0x38] sm:$0xff]
  %v562 = vld [vmem:[%s5 + $0x40] sm:$0xff]
  %v563 = vld [vmem:[%s5 + $0x48] sm:$0xff]
  %v564 = vld [vmem:[%s5 + $0x50] sm:$0xff]
  %v565 = vld [vmem:[%s5 + $0x58] sm:$0xff]
  %v566 = vld [vmem:[%s5 + $0x60] sm:$0xff]
  %v567 = vld [vmem:[%s5 + $0x68] sm:$0xff]
  %v568 = vld [vmem:[%s5 + $0x70] sm:$0xff]
  %v569 = vld [vmem:[%s5 + $0x78] sm:$0xff]
  %v570 = vld [vmem:[%s5 + $0x80] sm:$0xff]
  %v571 = vld [vmem:[%s5 + $0x88] sm:$0xff]
  %v572 = vld [vmem:[%s5 + $0x90] sm:$0x3f]
  %v573 = vld [vmem:[%s6] sm:$0xff]
  %v574 = vld [vmem:[%s6 + $0x8] sm:$0xff]
  %v575 = vld [vmem:[%s6 + $0x10] sm:$0xff]
  %v576 = vld [vmem:[%s6 + $0x18] sm:$0xff]
  %v577 = vld [vmem:[%s6 + $0x20] sm:$0xff]
  %v578 = vld [vmem:[%s6 + $0x28] sm:$0xff]
  %v579 = vld [vmem:[%s6 + $0x30] sm:$0xff]
  %v580 = vld [vmem:[%s6 + $0x38] sm:$0xff]
  %v581 = vld [vmem:[%s6 + $0x40] sm:$0xff]
  %v582 = vld [vmem:[%s6 + $0x48] sm:$0xff]
  %v583 = vld [vmem:[%s6 + $0x50] sm:$0xff]
  %v584 = vld [vmem:[%s6 + $0x58] sm:$0xff]
  %v585 = vld [vmem:[%s6 + $0x60] sm:$0xff]
  %v586 = vld [vmem:[%s6 + $0x68] sm:$0xff]
  %v587 = vld [vmem:[%s6 + $0x70] sm:$0xff]
  %v588 = vld [vmem:[%s6 + $0x78] sm:$0xff]
  %v589 = vld [vmem:[%s6 + $0x80] sm:$0xff]
  %v590 = vld [vmem:[%s6 + $0x88] sm:$0xff]
  %v591 = vld [vmem:[%s6 + $0x90] sm:$0x3f]
  %593 = vset.pattern.permute.xlu0 0
  %594 = vperm.xlu0 %593, %v573
  %v595 = vpop.permute.xlu0 %594
  %598 = vset.pattern.permute.xlu0 0
  %599 = vperm.xlu0 %598, %v574
  %v600 = vpop.permute.xlu0 %599
  %603 = vset.pattern.permute.xlu0 0
  %604 = vperm.xlu0 %603, %v575
  %v605 = vpop.permute.xlu0 %604
  %608 = vset.pattern.permute.xlu0 0
  %609 = vperm.xlu0 %608, %v576
  %v610 = vpop.permute.xlu0 %609
  %613 = vset.pattern.permute.xlu0 0
  %614 = vperm.xlu0 %613, %v577
  %v615 = vpop.permute.xlu0 %614
  %618 = vset.pattern.permute.xlu0 0
  %619 = vperm.xlu0 %618, %v578
  %v620 = vpop.permute.xlu0 %619
  %623 = vset.pattern.permute.xlu0 0
  %624 = vperm.xlu0 %623, %v579
  %v625 = vpop.permute.xlu0 %624
  %628 = vset.pattern.permute.xlu0 0
  %629 = vperm.xlu0 %628, %v580
  %v630 = vpop.permute.xlu0 %629
  %633 = vset.pattern.permute.xlu0 0
  %634 = vperm.xlu0 %633, %v581
  %v635 = vpop.permute.xlu0 %634
  %638 = vset.pattern.permute.xlu0 0
  %639 = vperm.xlu0 %638, %v582
  %v640 = vpop.permute.xlu0 %639
  %643 = vset.pattern.permute.xlu0 0
  %644 = vperm.xlu0 %643, %v583
  %v645 = vpop.permute.xlu0 %644
  %648 = vset.pattern.permute.xlu0 0
  %649 = vperm.xlu0 %648, %v584
  %v650 = vpop.permute.xlu0 %649
  %653 = vset.pattern.permute.xlu0 0
  %654 = vperm.xlu0 %653, %v585
  %v655 = vpop.permute.xlu0 %654
  %658 = vset.pattern.permute.xlu0 0
  %659 = vperm.xlu0 %658, %v586
  %v660 = vpop.permute.xlu0 %659
  %663 = vset.pattern.permute.xlu0 0
  %664 = vperm.xlu0 %663, %v587
  %v665 = vpop.permute.xlu0 %664
  %668 = vset.pattern.permute.xlu0 0
  %669 = vperm.xlu0 %668, %v588
  %v670 = vpop.permute.xlu0 %669
  %673 = vset.pattern.permute.xlu0 0
  %674 = vperm.xlu0 %673, %v589
  %v675 = vpop.permute.xlu0 %674
  %678 = vset.pattern.permute.xlu0 0
  %679 = vperm.xlu0 %678, %v590
  %v680 = vpop.permute.xlu0 %679
  %683 = vset.pattern.permute.xlu0 0
  %684 = vperm.xlu0 %683, %v591
  %v685 = vpop.permute.xlu0 %684
  %vm687 = vcmask 818176
  %v689 = vsel %vm687, %v554, 0
  %v692 = vsel %vm687, %v555, 0
  %v695 = vsel %vm687, %v556, 0
  %v698 = vsel %vm687, %v557, 0
  %v701 = vsel %vm687, %v558, 0
  %v704 = vsel %vm687, %v559, 0
  %v707 = vsel %vm687, %v560, 0
  %v710 = vsel %vm687, %v561, 0
  %v713 = vsel %vm687, %v562, 0
  %v716 = vsel %vm687, %v563, 0
  %v719 = vsel %vm687, %v564, 0
  %v722 = vsel %vm687, %v565, 0
  %v725 = vsel %vm687, %v566, 0
  %v728 = vsel %vm687, %v567, 0
  %v731 = vsel %vm687, %v568, 0
  %v734 = vsel %vm687, %v569, 0
  %v737 = vsel %vm687, %v570, 0
  %v740 = vsel %vm687, %v571, 0
  %v743 = vsel %vm687, %v572, 0
  %vm745 = vcmask 1043456
  %v747 = vsel %vm745, %v553, 0
  %749 = vmatprep.subr.mxu0 0.0
  %750 = vmatpush1.msra.mxu0 %v541
  %751 = vmatprep.subr.mxu0 0.0
  %752 = vmatpush1.msra.mxu0 %v542
  %753 = vmatprep.subr.mxu0 0.0
  %754 = vmatpush1.msra.mxu0 %v543
  %755 = vmatprep.subr.mxu0 0.0
  %756 = vmatpush1.msra.mxu0 %v544
  %757 = vmatprep.subr.mxu0 0.0
  %758 = vmatpush1.msra.mxu0 %v545
  %759 = vmatprep.subr.mxu0 0.0
  %760 = vmatpush1.msra.mxu0 %v546
  %761 = vmatprep.subr.mxu0 0.0
  %762 = vmatpush1.msra.mxu0 %v547
  %763 = vmatprep.subr.mxu0 0.0
  %764 = vmatpush1.msra.mxu0 %v548
  %765 = vmatprep.subr.mxu0 0.0
  %766 = vmatpush1.msra.mxu0 %v549
  %767 = vmatprep.subr.mxu0 0.0
  %768 = vmatpush1.msra.mxu0 %v550
  %769 = vmatprep.subr.mxu0 0.0
  %770 = vmatpush1.msra.mxu0 %v551
  %771 = vmatprep.subr.mxu0 0.0
  %772 = vmatpush1.msra.mxu0 %v552
  %773 = vmatprep.subr.mxu0 0.0
  %774 = vmatpush1.msra.mxu0 %v747
  %775 = vmatprep.subr.mxu0 0.0
  %776 = vmatpush1.msra.mxu0 0.0
  %777 = vmatprep.subr.mxu0 0.0
  %778 = vmatpush1.msra.mxu0 0.0
  %779 = vmatprep.subr.mxu0 0.0
  %780 = vmatpush1.msra.mxu0 0.0
  %781 = vmatprep.subr.mxu0 0.0
  %782 = vmatpush1.msra.mxu0 0.0
  %783 = vmatprep.subr.mxu0 0.0
  %784 = vmatpush1.msra.mxu0 0.0
  %785 = vmatprep.subr.mxu0 0.0
  %786 = vmatpush1.msra.mxu0 0.0
  %787 = vmatprep.subr.mxu0 0.0
  %788 = vmatpush1.msra.mxu0 0.0
  %789 = vmatprep.subr.mxu0 0.0
  %790 = vmatpush1.msra.mxu0 0.0
  %791 = vmatprep.subr.mxu0 0.0
  %792 = vmatpush1.msra.mxu0 0.0
  %793 = vmatprep.subr.mxu0 0.0
  %794 = vmatpush1.msra.mxu0 0.0
  %795 = vmatprep.subr.mxu0 0.0
  %796 = vmatpush1.msra.mxu0 0.0
  %797 = vmatprep.subr.mxu0 0.0
  %798 = vmatpush1.msra.mxu0 0.0
  %799 = vmatprep.subr.mxu0 0.0
  %800 = vmatpush1.msra.mxu0 0.0
  %801 = vmatprep.subr.mxu0 0.0
  %802 = vmatpush1.msra.mxu0 0.0
  %803 = vmatprep.subr.mxu0 0.0
  %804 = vmatpush1.msra.mxu0 0.0
  %805 = vmatprep.subr.mxu0 0.0
  %806 = vmatpush1.msra.mxu0 0.0
  %807 = vmatprep.subr.mxu0 0.0
  %808 = vmatpush1.msra.mxu0 0.0
  %809 = vmatprep.subr.mxu0 0.0
  %810 = vmatpush1.msra.mxu0 0.0
  %811 = vmatprep.subr.mxu0 0.0
  %812 = vmatpush1.msra.mxu0 0.0
  %813 = vmatprep.mubr.f32.mxu0 0.0
  %814 = vmatmul.mubr.f32.gmra.mrb[0].mxu0 %v689
  %v815 = vpop.f32.mrb[0].mxu0
  %v816 = vadd.f32 %v595, %v815
  %v817 = vpop.f32.mrb[0].mxu0
  %818 = vmatprep.mubr.f32.mxu0 0.0
  %819 = vmatmul.mubr.f32.gmra.mrb[0].mxu0 %v692
  %v820 = vpop.f32.mrb[0].mxu0
  %v821 = vadd.f32 %v600, %v820
  %v822 = vpop.f32.mrb[0].mxu0
  %823 = vmatprep.mubr.f32.mxu0 0.0
  %824 = vmatmul.mubr.f32.gmra.mrb[0].mxu0 %v695
  %v825 = vpop.f32.mrb[0].mxu0
  %v826 = vadd.f32 %v605, %v825
  %v827 = vpop.f32.mrb[0].mxu0
  %828 = vmatprep.mubr.f32.mxu0 0.0
  %829 = vmatmul.mubr.f32.gmra.mrb[0].mxu0 %v698
  %v830 = vpop.f32.mrb[0].mxu0
  %v831 = vadd.f32 %v610, %v830
  %v832 = vpop.f32.mrb[0].mxu0
  %833 = vmatprep.mubr.f32.mxu0 0.0
  %834 = vmatmul.mubr.f32.gmra.mrb[0].mxu0 %v701
  %v835 = vpop.f32.mrb[0].mxu0
  %v836 = vadd.f32 %v615, %v835
  %v837 = vpop.f32.mrb[0].mxu0
  %838 = vmatprep.mubr.f32.mxu0 0.0
  %839 = vmatmul.mubr.f32.gmra.mrb[0].mxu0 %v704
  %v840 = vpop.f32.mrb[0].mxu0
  %v841 = vadd.f32 %v620, %v840
  %v842 = vpop.f32.mrb[0].mxu0
  %843 = vmatprep.mubr.f32.mxu0 0.0
  %844 = vmatmul.mubr.f32.gmra.mrb[0].mxu0 %v707
  %v845 = vpop.f32.mrb[0].mxu0
  %v846 = vadd.f32 %v625, %v845
  %v847 = vpop.f32.mrb[0].mxu0
  %848 = vmatprep.mubr.f32.mxu0 0.0
  %849 = vmatmul.mubr.f32.gmra.mrb[0].mxu0 %v710
  %v850 = vpop.f32.mrb[0].mxu0
  %v851 = vadd.f32 %v630, %v850
  %v852 = vpop.f32.mrb[0].mxu0
  %853 = vmatprep.mubr.f32.mxu0 0.0
  %854 = vmatmul.mubr.f32.gmra.mrb[0].mxu0 %v713
  %v855 = vpop.f32.mrb[0].mxu0
  %v856 = vadd.f32 %v635, %v855
  %v857 = vpop.f32.mrb[0].mxu0
  %858 = vmatprep.mubr.f32.mxu0 0.0
  %859 = vmatmul.mubr.f32.gmra.mrb[0].mxu0 %v716
  %v860 = vpop.f32.mrb[0].mxu0
  %v861 = vadd.f32 %v640, %v860
  %v862 = vpop.f32.mrb[0].mxu0
  %863 = vmatprep.mubr.f32.mxu0 0.0
  %864 = vmatmul.mubr.f32.gmra.mrb[0].mxu0 %v719
  %v865 = vpop.f32.mrb[0].mxu0
  %v866 = vadd.f32 %v645, %v865
  %v867 = vpop.f32.mrb[0].mxu0
  %868 = vmatprep.mubr.f32.mxu0 0.0
  %869 = vmatmul.mubr.f32.gmra.mrb[0].mxu0 %v722
  %v870 = vpop.f32.mrb[0].mxu0
  %v871 = vadd.f32 %v650, %v870
  %v872 = vpop.f32.mrb[0].mxu0
  %873 = vmatprep.mubr.f32.mxu0 0.0
  %874 = vmatmul.mubr.f32.gmra.mrb[0].mxu0 %v725
  %v875 = vpop.f32.mrb[0].mxu0
  %v876 = vadd.f32 %v655, %v875
  %v877 = vpop.f32.mrb[0].mxu0
  %878 = vmatprep.mubr.f32.mxu0 0.0
  %879 = vmatmul.mubr.f32.gmra.mrb[0].mxu0 %v728
  %v880 = vpop.f32.mrb[0].mxu0
  %v881 = vadd.f32 %v660, %v880
  %v882 = vpop.f32.mrb[0].mxu0
  %883 = vmatprep.mubr.f32.mxu0 0.0
  %884 = vmatmul.mubr.f32.gmra.mrb[0].mxu0 %v731
  %v885 = vpop.f32.mrb[0].mxu0
  %v886 = vadd.f32 %v665, %v885
  %v887 = vpop.f32.mrb[0].mxu0
  %888 = vmatprep.mubr.f32.mxu0 0.0
  %889 = vmatmul.mubr.f32.gmra.mrb[0].mxu0 %v734
  %v890 = vpop.f32.mrb[0].mxu0
  %v891 = vadd.f32 %v670, %v890
  %v892 = vpop.f32.mrb[0].mxu0
  %893 = vmatprep.mubr.f32.mxu0 0.0
  %894 = vmatmul.mubr.f32.gmra.mrb[0].mxu0 %v737
  %v895 = vpop.f32.mrb[0].mxu0
  %v896 = vadd.f32 %v675, %v895
  %v897 = vpop.f32.mrb[0].mxu0
  %898 = vmatprep.mubr.f32.mxu0 0.0
  %899 = vmatmul.mubr.f32.gmra.mrb[0].mxu0 %v740
  %v900 = vpop.f32.mrb[0].mxu0
  %v901 = vadd.f32 %v680, %v900
  %v902 = vpop.f32.mrb[0].mxu0
  %903 = vmatprep.mubr.f32.mxu0 0.0
  %904 = vmatmul.mubr.f32.gmra.mrb[0].mxu0 %v743
  %v905 = vpop.f32.mrb[0].mxu0
  %v906 = vadd.f32 %v685, %v905
  %v907 = vpop.f32.mrb[0].mxu0
  %908 = vdwg.mxu0
  %v909 = vmax.f32 %v816, 0.0
  %v910 = vmax.f32 %v821, 0.0
  %v911 = vmax.f32 %v826, 0.0
  %v912 = vmax.f32 %v831, 0.0
  %v913 = vmax.f32 %v836, 0.0
  %v914 = vmax.f32 %v841, 0.0
  %v915 = vmax.f32 %v846, 0.0
  %v916 = vmax.f32 %v851, 0.0
  %v917 = vmax.f32 %v856, 0.0
  %v918 = vmax.f32 %v861, 0.0
  %v919 = vmax.f32 %v866, 0.0
  %v920 = vmax.f32 %v871, 0.0
  %v921 = vmax.f32 %v876, 0.0
  %v922 = vmax.f32 %v881, 0.0
  %v923 = vmax.f32 %v886, 0.0
  %v924 = vmax.f32 %v891, 0.0
  %v925 = vmax.f32 %v896, 0.0
  %v926 = vmax.f32 %v901, 0.0
  %v927 = vmax.f32 %v906, 0.0
  %v928 = vld [vmem:[%s7] sm:$0xff]
  %v929 = vld [vmem:[%s7 + $0x8] sm:$0xff]
  %v930 = vld [vmem:[%s7 + $0x10] sm:$0xff]
  %v931 = vld [vmem:[%s7 + $0x18] sm:$0xff]
  %v932 = vld [vmem:[%s7 + $0x20] sm:$0xff]
  %v933 = vld [vmem:[%s7 + $0x28] sm:$0xff]
  %v934 = vld [vmem:[%s7 + $0x30] sm:$0xff]
  %v935 = vld [vmem:[%s7 + $0x38] sm:$0xff]
  %v936 = vld [vmem:[%s7 + $0x40] sm:$0xff]
  %v937 = vld [vmem:[%s7 + $0x48] sm:$0xff]
  %v938 = vld [vmem:[%s7 + $0x50] sm:$0xff]
  %v939 = vld [vmem:[%s7 + $0x58] sm:$0xff]
  %v940 = vld [vmem:[%s7 + $0x60] sm:$0xff]
  %v941 = vld [vmem:[%s7 + $0x68] sm:$0xff]
  %v942 = vld [vmem:[%s7 + $0x70] sm:$0xff]
  %v943 = vld [vmem:[%s7 + $0x78] sm:$0xff]
  %v944 = vld [vmem:[%s7 + $0x80] sm:$0xff]
  %v945 = vld [vmem:[%s7 + $0x88] sm:$0xff]
  %v946 = vld [vmem:[%s7 + $0x90] sm:$0x3f]
  %948 = vset.pattern.permute.xlu0 0
  %949 = vperm.xlu0 %948, %v928
  %v950 = vpop.permute.xlu0 %949
  %953 = vset.pattern.permute.xlu0 0
  %954 = vperm.xlu0 %953, %v929
  %v955 = vpop.permute.xlu0 %954
  %958 = vset.pattern.permute.xlu0 0
  %959 = vperm.xlu0 %958, %v930
  %v960 = vpop.permute.xlu0 %959
  %963 = vset.pattern.permute.xlu0 0
  %964 = vperm.xlu0 %963, %v931
  %v965 = vpop.permute.xlu0 %964
  %968 = vset.pattern.permute.xlu0 0
  %969 = vperm.xlu0 %968, %v932
  %v970 = vpop.permute.xlu0 %969
  %973 = vset.pattern.permute.xlu0 0
  %974 = vperm.xlu0 %973, %v933
  %v975 = vpop.permute.xlu0 %974
  %978 = vset.pattern.permute.xlu0 0
  %979 = vperm.xlu0 %978, %v934
  %v980 = vpop.permute.xlu0 %979
  %983 = vset.pattern.permute.xlu0 0
  %984 = vperm.xlu0 %983, %v935
  %v985 = vpop.permute.xlu0 %984
  %988 = vset.pattern.permute.xlu0 0
  %989 = vperm.xlu0 %988, %v936
  %v990 = vpop.permute.xlu0 %989
  %993 = vset.pattern.permute.xlu0 0
  %994 = vperm.xlu0 %993, %v937
  %v995 = vpop.permute.xlu0 %994
  %998 = vset.pattern.permute.xlu0 0
  %999 = vperm.xlu0 %998, %v938
  %v1000 = vpop.permute.xlu0 %999
  %1003 = vset.pattern.permute.xlu0 0
  %1004 = vperm.xlu0 %1003, %v939
  %v1005 = vpop.permute.xlu0 %1004
  %1008 = vset.pattern.permute.xlu0 0
  %1009 = vperm.xlu0 %1008, %v940
  %v1010 = vpop.permute.xlu0 %1009
  %1013 = vset.pattern.permute.xlu0 0
  %1014 = vperm.xlu0 %1013, %v941
  %v1015 = vpop.permute.xlu0 %1014
  %1018 = vset.pattern.permute.xlu0 0
  %1019 = vperm.xlu0 %1018, %v942
  %v1020 = vpop.permute.xlu0 %1019
  %1023 = vset.pattern.permute.xlu0 0
  %1024 = vperm.xlu0 %1023, %v943
  %v1025 = vpop.permute.xlu0 %1024
  %1028 = vset.pattern.permute.xlu0 0
  %1029 = vperm.xlu0 %1028, %v944
  %v1030 = vpop.permute.xlu0 %1029
  %1033 = vset.pattern.permute.xlu0 0
  %1034 = vperm.xlu0 %1033, %v945
  %v1035 = vpop.permute.xlu0 %1034
  %1038 = vset.pattern.permute.xlu0 0
  %1039 = vperm.xlu0 %1038, %v946
  %v1040 = vpop.permute.xlu0 %1039
  %v1042 = vmul.f32 %v909, %v950
  %v1043 = vmul.f32 %v910, %v955
  %v1044 = vmul.f32 %v911, %v960
  %v1045 = vmul.f32 %v912, %v965
  %v1046 = vmul.f32 %v913, %v970
  %v1047 = vmul.f32 %v914, %v975
  %v1048 = vmul.f32 %v915, %v980
  %v1049 = vmul.f32 %v916, %v985
  %v1050 = vmul.f32 %v917, %v990
  %v1051 = vmul.f32 %v918, %v995
  %v1052 = vmul.f32 %v919, %v1000
  %v1053 = vmul.f32 %v920, %v1005
  %v1054 = vmul.f32 %v921, %v1010
  %v1055 = vmul.f32 %v922, %v1015
  %v1056 = vmul.f32 %v923, %v1020
  %v1057 = vmul.f32 %v924, %v1025
  %v1058 = vmul.f32 %v925, %v1030
  %v1059 = vmul.f32 %v926, %v1035
  %v1060 = vmul.f32 %v927, %v1040
  %v1061 = vadd.f32 %v1042, %v1043
  %v1062 = vadd.f32 %v1061, %v1044
  %v1063 = vadd.f32 %v1062, %v1045
  %v1064 = vadd.f32 %v1063, %v1046
  %v1065 = vadd.f32 %v1064, %v1047
  %v1066 = vadd.f32 %v1065, %v1048
  %v1067 = vadd.f32 %v1066, %v1049
  %v1068 = vadd.f32 %v1067, %v1050
  %v1069 = vadd.f32 %v1068, %v1051
  %v1070 = vadd.f32 %v1069, %v1052
  %v1071 = vadd.f32 %v1070, %v1053
  %v1072 = vadd.f32 %v1071, %v1054
  %v1073 = vadd.f32 %v1072, %v1055
  %v1074 = vadd.f32 %v1073, %v1056
  %v1075 = vadd.f32 %v1074, %v1057
  %v1076 = vadd.f32 %v1075, %v1058
  %v1077 = vadd.f32 %v1076, %v1059
  %vm1078 = vcmask 1045504
  %v1079 = vsel %vm1078, %v1060, 0.0
  %v1080 = vadd.f32 %v1077, %v1079
  %v1081 = vrot.slane %v1080, 4
  %v1082 = vadd.f32 %v1080, %v1081
  %v1083 = vrot.slane %v1082, 2
  %v1084 = vadd.f32 %v1082, %v1083
  %v1085 = vrot.slane %v1084, 1
  %v1086 = vadd.f32 %v1084, %v1085
  %v1087 = vld [vmem:[#allocation2] sm:$0x1]
  %1089 = vset.pattern.permute.xlu0 0
  %1090 = vperm.xlu0 %1089, %v1087
  %v1091 = vpop.permute.xlu0 %1090
  %v1093 = vlaneseq
  %v1094 = vshrl.u32 %v1093, 7
  %v1095 = vsub.s32 0, %v1094
  %v1096 = vrot.slane %v1091, %v1095
  %v1097 = vadd.f32 %v1086, %v1096
  %1098 = vst [vmem:[%s9] sm:$0x1] %v1097
  // Predicated region
  $region38: #{mlp_forward.1} parent=0 // pred_check
    _
  $region39: #{mlp_forward.1} parent=0 // pred_check_branch
    %1100 = sbr.rel (0) target = $region41
  $region40: #{mlp_forward.1} parent=0 // pred_region
    _
  $region41: #{mlp_forward.1} parent=0 // pred_fallthru
    _
  // Predicated region
  $region42: #{mlp_forward.1} parent=0 // pred_check
    _
  $region43: #{mlp_forward.1} parent=0 // pred_check_branch
    %1102 = sbr.rel (0) target = $region45
  $region44: #{mlp_forward.1} parent=0 // pred_region
    _
  $region45: #{mlp_forward.1} parent=0 // pred_fallthru
    _

</llo_original>
